<compile_context>
chip_gen: v7x
topology: tpu7x:2x2x1
jax: 0.10.0
libtpu: 0.0.40
codegen_flags: <defaults>
</compile_context>

<pallas_src>
import jax
import jax.numpy as jnp
import numpy as np
from jax.experimental import pallas as pl
from jax.experimental.pallas import tpu as pltpu


def _joint_loss_kernel(joints_ref, gt_ref, mask_ref, cc_ref, out_ref):
    # joints_ref: (3, Jp, TB)   gt_ref: (2, Jp, TB)
    # mask_ref:   (Jp, 1)       cc_ref: (16, TB)     out_ref: (8, TB)
    x = joints_ref[0]
    y = joints_ref[1]
    z = joints_ref[2]
    gx = gt_ref[0]
    gy = gt_ref[1]
    cc = cc_ref[...]                      # (16, TB) per-batch camera constants

    # Camera-frame coordinates: unrolled 3x3 multiply-adds on the VPU (no MXU).
    # Each (1, TB) coefficient row broadcasts along the sublane (joint) axis,
    # which involves no cross-lane data movement.  fx/fy/t_x/t_y are already
    # folded into rows 0-5, 9, 10 on the host.
    cx = cc[0:1] * x + cc[1:2] * y + cc[2:3] * z + cc[9:10]
    cy = cc[3:4] * x + cc[4:5] * y + cc[5:6] * z + cc[10:11]
    cz = cc[6:7] * x + cc[7:8] * y + cc[8:9] * z + cc[11:12]

    # EUP reciprocal (otherwise-idle slot) + one Newton step -> ~f32 accuracy.
    inv_z = pl.reciprocal(cz, approx=True)
    inv_z = inv_z * (2.0 - cz * inv_z)

    ix = cx * inv_z + cc[12:13]
    iy = cy * inv_z + cc[13:14]

    # mask carries occurrence counts (duplicate indices) * data_weight**2;
    # padded joint rows / padded batch lanes contribute exactly zero by
    # construction (host pads joints with the last real joint and sets t_z=1
    # on padded lanes), so no where-guard is required.
    err = ((gx - ix) ** 2 + (gy - iy) ** 2) * mask_ref[...]   # (Jp,TB)*(Jp,1)

    # VALU-only fold of the joint (sublane) axis down to one 8-sublane tile;
    # final cross-lane reduction happens outside the kernel.
    jp = err.shape[0]
    part = err[0:8, :]
    for g in range(1, jp // 8):
        part = part + err[g * 8:(g + 1) * 8, :]
    out_ref[...] = part


def smplify_camera_init_loss(joints, gt_joints, rotation, translation,
                             focal_length, center, init_joints_idxs,
                             trans_estimation=None, data_weight=1.0,
                             depth_loss_weight=100.0, batch_tile=2048):
    """joints: (B, J, 3) f32; gt_joints: (B, J, 2) f32; rotation: (B, 3, 3);
    translation: (B, 3); focal_length: (fx, fy) python floats; center: (B, 2);
    init_joints_idxs: int array; trans_estimation: (B, 3) or None.
    Returns scalar f32 loss."""
    B, J, _ = joints.shape
    f32 = jnp.float32
    LANE = 128

    Jp = pl.cdiv(J, 8) * 8                       # joints -> sublane axis
    bt = max(LANE, (int(batch_tile) // LANE) * LANE)
    Bp_min = pl.cdiv(B, LANE) * LANE             # batch -> lane axis
    if Bp_min >= 2 * LANE:
        # keep >= 2 grid steps so the "parallel" batch axis can shard across
        # the two TensorCores of a v7x chip (no-op on v5e/v6e).
        half = max(LANE, (Bp_min // 2) // LANE * LANE)
        TB = min(bt, half)
    else:
        TB = LANE
    Bpad = pl.cdiv(B, TB) * TB
    nb = Bpad // TB

    fx = f32(focal_length[0])
    fy = f32(focal_length[1])

    joints = joints.astype(f32)
    gtj = gt_joints.astype(f32)
    rotation = rotation.astype(f32)
    translation = translation.astype(f32)
    center = center.astype(f32)

    # channel-major, joints on sublanes, batch on lanes: (C, Jp, Bpad)
    jt = jnp.transpose(joints, (2, 1, 0))        # (3, J, B)
    gt_t = jnp.transpose(gtj, (2, 1, 0))         # (2, J, B)
    if Jp > J:
        # replicate the last real joint into padded rows: cz stays finite for
        # real batch lanes (the mask zeroes those rows anyway).
        jt = jnp.concatenate(
            [jt, jnp.broadcast_to(jt[:, J - 1:J, :], (3, Jp - J, B))], axis=1)
        gt_t = jnp.concatenate([gt_t, jnp.zeros((2, Jp - J, B), f32)], axis=1)
    joints_p = jnp.zeros((3, Jp, Bpad), f32).at[:, :, :B].set(jt)
    gt_p = jnp.zeros((2, Jp, Bpad), f32).at[:, :, :B].set(gt_t)

    # selection mask: occurrence counts (handles duplicate indices) with
    # data_weight**2 folded in; one (Jp, 1) column, resident across the grid.
    mask_j = jnp.zeros((Jp,), f32).at[init_joints_idxs].add(1.0)
    mask_col = (mask_j * f32(data_weight) ** 2).reshape(Jp, 1)

    # packed per-batch camera constants (16, Bpad), batch on lanes:
    #   rows 0-2: fx*R[0,:]  rows 3-5: fy*R[1,:]  rows 6-8: R[2,:]
    #   row 9: fx*t_x   row 10: fy*t_y   row 11: t_z (1.0 on padded lanes)
    #   rows 12-13: center   rows 14-15: padding
    Rf = rotation.reshape(B, 9)
    cc = jnp.zeros((16, Bpad), f32)
    cc = cc.at[11, :].set(1.0)                   # padded lanes: cz = 1 (no 1/0)
    cc = cc.at[0:3, :B].set((Rf[:, 0:3] * fx).T)
    cc = cc.at[3:6, :B].set((Rf[:, 3:6] * fy).T)
    cc = cc.at[6:9, :B].set(Rf[:, 6:9].T)
    cc = cc.at[9, :B].set(translation[:, 0] * fx)
    cc = cc.at[10, :B].set(translation[:, 1] * fy)
    cc = cc.at[11, :B].set(translation[:, 2])
    cc = cc.at[12:14, :B].set(center.T)

    partial = pl.pallas_call(
        _joint_loss_kernel,
        out_shape=jax.ShapeDtypeStruct((8, Bpad), f32),
        grid_spec=pltpu.PrefetchScalarGridSpec(
            num_scalar_prefetch=0,
            grid=(nb,),
            in_specs=[
                pl.BlockSpec((3, Jp, TB), lambda i: (0, 0, i)),   # joints
                pl.BlockSpec((2, Jp, TB), lambda i: (0, 0, i)),   # gt joints
                pl.BlockSpec((Jp, 1), lambda i: (0, 0)),          # mask (resident)
                pl.BlockSpec((16, TB), lambda i: (0, i)),         # camera consts
            ],
            out_specs=pl.BlockSpec((8, TB), lambda i: (0, i)),
        ),
        compiler_params=pltpu.CompilerParams(
            dimension_semantics=("parallel",)),
        # Double-buffered working set ~ (5*Jp + 24)*TB*4*2 bytes (~3 MiB at
        # Jp=32, TB=2048) -> default scoped VMEM limits are fine on all gens.
    )(joints_p, gt_p, mask_col, cc)

    joint_loss = jnp.sum(partial)

    # Depth term: O(B) scalar work, kept in plain XLA (removed from the kernel
    # so there is no serial scalar dependency chain on the critical path).
    if trans_estimation is not None and float(depth_loss_weight) > 0.0:
        te = trans_estimation.astype(f32)
        depth_loss = f32(depth_loss_weight) ** 2 * jnp.sum(
            (translation[:, 2] - te[:, 2]) ** 2)
        return joint_loss + depth_loss
    return joint_loss


def _reference_loss(joints, gt_joints, rotation, translation, focal_length,
                    center, init_joints_idxs, trans_estimation,
                    data_weight, depth_loss_weight):
    # pure-JAX reference replicating the PyTorch forward (incl. the camera)
    cam = jnp.einsum('bki,bji->bjk', rotation, joints) + translation[:, None, :]
    img = cam[..., :2] / cam[..., 2:3]
    proj = img * jnp.array(focal_length)[None, None, :] + center[:, None, :]
    ge = jnp.take(gt_joints, init_joints_idxs, axis=1)
    pe = jnp.take(proj, init_joints_idxs, axis=1)
    joint_loss = jnp.sum((ge - pe) ** 2) * data_weight ** 2
    depth_loss = depth_loss_weight ** 2 * jnp.sum(
        (translation[:, 2] - trans_estimation[:, 2]) ** 2)
    return joint_loss + depth_loss


if __name__ == "__main__":
    key = jax.random.PRNGKey(0)
    B, J = 2, 16
    k1, k2, k3 = jax.random.split(key, 3)

    joints = jax.random.normal(k1, (B, J, 3), jnp.float32) * 0.5
    joints = joints.at[..., 2].add(5.0)                    # keep points in front
    gt_joints = jax.random.normal(k2, (B, J, 2), jnp.float32) * 10.0

    rotation = (jnp.tile(jnp.eye(3, dtype=jnp.float32)[None], (B, 1, 1))
                + 0.01 * jax.random.normal(k3, (B, 3, 3), jnp.float32))
    translation = jnp.array([[0.1, -0.2, 2.5], [-0.05, 0.15, 3.0]], jnp.float32)
    focal_length = (500.0, 500.0)
    center = jnp.array([[112.0, 112.0], [112.0, 112.0]], jnp.float32)

    init_joints_idxs = jnp.array([0, 2, 5, 7, 9, 12], jnp.int32)
    trans_estimation = jnp.array([[0.0, 0.0, 2.7], [0.0, 0.0, 2.9]], jnp.float32)
    data_weight = 1.0
    depth_loss_weight = 100.0

    # jit the whole wrapper so host-side pads/transposes fuse with the kernel;
    # in a real SMPLify fitting loop this is traced once and reused per step.
    loss_fn = jax.jit(
        smplify_camera_init_loss,
        static_argnames=("focal_length", "data_weight", "depth_loss_weight",
                         "batch_tile"))
    loss = loss_fn(joints, gt_joints, rotation, translation,
                   focal_length=focal_length, center=center,
                   init_joints_idxs=init_joints_idxs,
                   trans_estimation=trans_estimation,
                   data_weight=data_weight,
                   depth_loss_weight=depth_loss_weight)
    loss = jax.block_until_ready(loss)

    ref = _reference_loss(joints, gt_joints, rotation, translation, focal_length,
                          center, init_joints_idxs, trans_estimation,
                          data_weight, depth_loss_weight)
    np.testing.assert_allclose(np.asarray(loss), np.asarray(ref),
                               rtol=1e-4, atol=1e-3)

    print("KERNEL_OK")
</pallas_src>

<mosaic_0001>
module attributes {stable_mosaic.version = 11 : i64} {
  func.func @_joint_loss_kernel(%arg0: i32, %arg1: memref<3x16x128xf32, #tpu.memory_space<vmem>>, %arg2: memref<2x16x128xf32, #tpu.memory_space<vmem>>, %arg3: memref<16x1xf32, #tpu.memory_space<vmem>>, %arg4: memref<16x128xf32, #tpu.memory_space<vmem>>, %arg5: memref<8x128xf32, #tpu.memory_space<vmem>>) attributes {dimension_semantics = [#tpu.dimension_semantics<parallel>], iteration_bounds = array<i64: 1>, scalar_prefetch = 0 : i64, scratch_operands = 0 : i64, tpu.core_type = #tpu.core_type<tc>, window_params = [{transform_indices = @transform_0, window_bounds = array<i64: 3, 16, 128>}, {transform_indices = @transform_1, window_bounds = array<i64: 2, 16, 128>}, {pipeline_mode = #tpu.pipeline_mode<synchronous>, transform_indices = @transform_2, window_bounds = array<i64: 16, 1>}, {transform_indices = @transform_3, window_bounds = array<i64: 16, 128>}, {transform_indices = @transform_4, window_bounds = array<i64: 8, 128>}]} {
    %c0 = arith.constant 0 : index
    %c0_0 = arith.constant 0 : index
    %c0_1 = arith.constant 0 : index
    %0 = vector.load %arg1[%c0, %c0_0, %c0_1] : memref<3x16x128xf32, #tpu.memory_space<vmem>>, vector<1x16x128xf32>
    %1 = vector.shape_cast %0 : vector<1x16x128xf32> to vector<16x128xf32>
    %c1 = arith.constant 1 : index
    %c0_2 = arith.constant 0 : index
    %c0_3 = arith.constant 0 : index
    %2 = vector.load %arg1[%c1, %c0_2, %c0_3] : memref<3x16x128xf32, #tpu.memory_space<vmem>>, vector<1x16x128xf32>
    %3 = vector.shape_cast %2 : vector<1x16x128xf32> to vector<16x128xf32>
    %c2 = arith.constant 2 : index
    %c0_4 = arith.constant 0 : index
    %c0_5 = arith.constant 0 : index
    %4 = vector.load %arg1[%c2, %c0_4, %c0_5] : memref<3x16x128xf32, #tpu.memory_space<vmem>>, vector<1x16x128xf32>
    %5 = vector.shape_cast %4 : vector<1x16x128xf32> to vector<16x128xf32>
    %c0_6 = arith.constant 0 : index
    %c0_7 = arith.constant 0 : index
    %c0_8 = arith.constant 0 : index
    %6 = vector.load %arg2[%c0_6, %c0_7, %c0_8] : memref<2x16x128xf32, #tpu.memory_space<vmem>>, vector<1x16x128xf32>
    %7 = vector.shape_cast %6 : vector<1x16x128xf32> to vector<16x128xf32>
    %c1_9 = arith.constant 1 : index
    %c0_10 = arith.constant 0 : index
    %c0_11 = arith.constant 0 : index
    %8 = vector.load %arg2[%c1_9, %c0_10, %c0_11] : memref<2x16x128xf32, #tpu.memory_space<vmem>>, vector<1x16x128xf32>
    %9 = vector.shape_cast %8 : vector<1x16x128xf32> to vector<16x128xf32>
    %c0_12 = arith.constant 0 : index
    %c0_13 = arith.constant 0 : index
    %10 = vector.load %arg4[%c0_12, %c0_13] : memref<16x128xf32, #tpu.memory_space<vmem>>, vector<16x128xf32>
    %11 = vector.extract_strided_slice %10 {offsets = [0, 0], sizes = [1, 128], strides = [1, 1]} : vector<16x128xf32> to vector<1x128xf32>
    %12 = vector.broadcast %11 : vector<1x128xf32> to vector<16x128xf32>
    %13 = arith.mulf %12, %1 : vector<16x128xf32>
    %14 = vector.extract_strided_slice %10 {offsets = [1, 0], sizes = [1, 128], strides = [1, 1]} : vector<16x128xf32> to vector<1x128xf32>
    %15 = vector.broadcast %14 : vector<1x128xf32> to vector<16x128xf32>
    %16 = arith.mulf %15, %3 : vector<16x128xf32>
    %17 = arith.addf %13, %16 : vector<16x128xf32>
    %18 = vector.extract_strided_slice %10 {offsets = [2, 0], sizes = [1, 128], strides = [1, 1]} : vector<16x128xf32> to vector<1x128xf32>
    %19 = vector.broadcast %18 : vector<1x128xf32> to vector<16x128xf32>
    %20 = arith.mulf %19, %5 : vector<16x128xf32>
    %21 = arith.addf %17, %20 : vector<16x128xf32>
    %22 = vector.extract_strided_slice %10 {offsets = [9, 0], sizes = [1, 128], strides = [1, 1]} : vector<16x128xf32> to vector<1x128xf32>
    %23 = vector.broadcast %22 : vector<1x128xf32> to vector<16x128xf32>
    %24 = arith.addf %21, %23 : vector<16x128xf32>
    %25 = vector.extract_strided_slice %10 {offsets = [3, 0], sizes = [1, 128], strides = [1, 1]} : vector<16x128xf32> to vector<1x128xf32>
    %26 = vector.broadcast %25 : vector<1x128xf32> to vector<16x128xf32>
    %27 = arith.mulf %26, %1 : vector<16x128xf32>
    %28 = vector.extract_strided_slice %10 {offsets = [4, 0], sizes = [1, 128], strides = [1, 1]} : vector<16x128xf32> to vector<1x128xf32>
    %29 = vector.broadcast %28 : vector<1x128xf32> to vector<16x128xf32>
    %30 = arith.mulf %29, %3 : vector<16x128xf32>
    %31 = arith.addf %27, %30 : vector<16x128xf32>
    %32 = vector.extract_strided_slice %10 {offsets = [5, 0], sizes = [1, 128], strides = [1, 1]} : vector<16x128xf32> to vector<1x128xf32>
    %33 = vector.broadcast %32 : vector<1x128xf32> to vector<16x128xf32>
    %34 = arith.mulf %33, %5 : vector<16x128xf32>
    %35 = arith.addf %31, %34 : vector<16x128xf32>
    %36 = vector.extract_strided_slice %10 {offsets = [10, 0], sizes = [1, 128], strides = [1, 1]} : vector<16x128xf32> to vector<1x128xf32>
    %37 = vector.broadcast %36 : vector<1x128xf32> to vector<16x128xf32>
    %38 = arith.addf %35, %37 : vector<16x128xf32>
    %39 = vector.extract_strided_slice %10 {offsets = [6, 0], sizes = [1, 128], strides = [1, 1]} : vector<16x128xf32> to vector<1x128xf32>
    %40 = vector.broadcast %39 : vector<1x128xf32> to vector<16x128xf32>
    %41 = arith.mulf %40, %1 : vector<16x128xf32>
    %42 = vector.extract_strided_slice %10 {offsets = [7, 0], sizes = [1, 128], strides = [1, 1]} : vector<16x128xf32> to vector<1x128xf32>
    %43 = vector.broadcast %42 : vector<1x128xf32> to vector<16x128xf32>
    %44 = arith.mulf %43, %3 : vector<16x128xf32>
    %45 = arith.addf %41, %44 : vector<16x128xf32>
    %46 = vector.extract_strided_slice %10 {offsets = [8, 0], sizes = [1, 128], strides = [1, 1]} : vector<16x128xf32> to vector<1x128xf32>
    %47 = vector.broadcast %46 : vector<1x128xf32> to vector<16x128xf32>
    %48 = arith.mulf %47, %5 : vector<16x128xf32>
    %49 = arith.addf %45, %48 : vector<16x128xf32>
    %50 = vector.extract_strided_slice %10 {offsets = [11, 0], sizes = [1, 128], strides = [1, 1]} : vector<16x128xf32> to vector<1x128xf32>
    %51 = vector.broadcast %50 : vector<1x128xf32> to vector<16x128xf32>
    %52 = arith.addf %49, %51 : vector<16x128xf32>
    %53 = tpu.reciprocal %52 {approx = true} : vector<16x128xf32> -> vector<16x128xf32>
    %54 = arith.mulf %52, %53 : vector<16x128xf32>
    %cst = arith.constant 2.000000e+00 : f32
    %55 = vector.broadcast %cst : f32 to vector<16x128xf32>
    %56 = arith.subf %55, %54 : vector<16x128xf32>
    %57 = arith.mulf %53, %56 : vector<16x128xf32>
    %58 = arith.mulf %24, %57 : vector<16x128xf32>
    %59 = vector.extract_strided_slice %10 {offsets = [12, 0], sizes = [1, 128], strides = [1, 1]} : vector<16x128xf32> to vector<1x128xf32>
    %60 = vector.broadcast %59 : vector<1x128xf32> to vector<16x128xf32>
    %61 = arith.addf %58, %60 : vector<16x128xf32>
    %62 = arith.mulf %38, %57 : vector<16x128xf32>
    %63 = vector.extract_strided_slice %10 {offsets = [13, 0], sizes = [1, 128], strides = [1, 1]} : vector<16x128xf32> to vector<1x128xf32>
    %64 = vector.broadcast %63 : vector<1x128xf32> to vector<16x128xf32>
    %65 = arith.addf %62, %64 : vector<16x128xf32>
    %66 = arith.subf %7, %61 : vector<16x128xf32>
    %67 = arith.mulf %66, %66 : vector<16x128xf32>
    %68 = arith.subf %9, %65 : vector<16x128xf32>
    %69 = arith.mulf %68, %68 : vector<16x128xf32>
    %70 = arith.addf %67, %69 : vector<16x128xf32>
    %c0_14 = arith.constant 0 : index
    %c0_15 = arith.constant 0 : index
    %71 = vector.load %arg3[%c0_14, %c0_15] : memref<16x1xf32, #tpu.memory_space<vmem>>, vector<16x1xf32>
    %72 = vector.broadcast %71 : vector<16x1xf32> to vector<16x128xf32>
    %73 = arith.mulf %70, %72 : vector<16x128xf32>
    %74 = vector.extract_strided_slice %73 {offsets = [0, 0], sizes = [8, 128], strides = [1, 1]} : vector<16x128xf32> to vector<8x128xf32>
    %75 = vector.extract_strided_slice %73 {offsets = [8, 0], sizes = [8, 128], strides = [1, 1]} : vector<16x128xf32> to vector<8x128xf32>
    %76 = arith.addf %74, %75 : vector<8x128xf32>
    %c0_16 = arith.constant 0 : index
    %c0_17 = arith.constant 0 : index
    %77 = vector.load %arg5[%c0_16, %c0_17] : memref<8x128xf32, #tpu.memory_space<vmem>>, vector<8x128xf32>
    tpu.vector_store %arg5[%c0_16, %c0_17], %76 {strides = array<i32>} : memref<8x128xf32, #tpu.memory_space<vmem>>, vector<8x128xf32>,
    return
  }
  func.func @transform_0(%arg0: i32) -> (i32, i32, i32) {
    %c0_i32 = arith.constant 0 : i32
    %c0_i32_0 = arith.constant 0 : i32
    %c0_i32_1 = arith.constant 0 : i32
    return %c0_i32, %c0_i32_0, %arg0 : i32, i32, i32
  }
  func.func @transform_1(%arg0: i32) -> (i32, i32, i32) {
    %c0_i32 = arith.constant 0 : i32
    %c0_i32_0 = arith.constant 0 : i32
    %c0_i32_1 = arith.constant 0 : i32
    return %c0_i32, %c0_i32_0, %arg0 : i32, i32, i32
  }
  func.func @transform_2(%arg0: i32) -> (i32, i32) {
    %c0_i32 = arith.constant 0 : i32
    %c0_i32_0 = arith.constant 0 : i32
    %c0_i32_1 = arith.constant 0 : i32
    return %c0_i32, %c0_i32_0 : i32, i32
  }
  func.func @transform_3(%arg0: i32) -> (i32, i32) {
    %c0_i32 = arith.constant 0 : i32
    %c0_i32_0 = arith.constant 0 : i32
    return %c0_i32, %arg0 : i32, i32
  }
  func.func @transform_4(%arg0: i32) -> (i32, i32) {
    %c0_i32 = arith.constant 0 : i32
    %c0_i32_0 = arith.constant 0 : i32
    return %c0_i32, %arg0 : i32, i32
  }
}

</mosaic_0001>

<llo_original>
// kernel: smplify_camera_init_loss.1
$region0: #{smplify_camera_init_loss.1}
  #allocation0 [shape = 'u32[]', space=smem, size = 0x4, offset = 0x4, fixed_abs, tag = 'smem constant byte address 0x4 - core index']
  #allocation1 [shape = 'u32[144,128]{1,0:T(1,128)}', space=vmem, size = 0x12000, scoped, tag = 'internal scratch']
  %s0 = inlined_call_operand.vmem [shape: f32[3,16,128], index: 0, kind: input, shape index: {}]
  %s1 = inlined_call_operand.vmem [shape: f32[2,16,128], index: 1, kind: input, shape index: {}]
  %s2 = inlined_call_operand.vmem [shape: f32[16,1], index: 2, kind: input, shape index: {}]
  %s3 = inlined_call_operand.vmem [shape: f32[16,128], index: 3, kind: input, shape index: {}]
  %s4 = inlined_call_operand.vmem [shape: f32[8,128], index: 4, kind: output, shape index: {}]
  %s5 = sld [smem:[#allocation0]]
  $region26: #{smplify_camera_init_loss.1} parent=0
    _
  %s7 = ssub.s32 1, %s5
  %s8 = scalar_select 0, %s7, %s5
  // Predicated region
  $region2: #{smplify_camera_init_loss.1} parent=0 // pred_check
    _
  $region3: #{smplify_camera_init_loss.1} parent=0 // pred_check_branch
    %10 = sbr.rel (0) target = $region5
  $region4: #{smplify_camera_init_loss.1} parent=0 // pred_region
    _
  $region5: #{smplify_camera_init_loss.1} parent=0 // pred_fallthru
    _
  // Predicated region
  $region6: #{smplify_camera_init_loss.1} parent=0 // pred_check
    _
  $region7: #{smplify_camera_init_loss.1} parent=0 // pred_check_branch
    %12 = sbr.rel (0) target = $region9
  $region8: #{smplify_camera_init_loss.1} parent=0 // pred_region
    _
  $region9: #{smplify_camera_init_loss.1} parent=0 // pred_fallthru
    _
  // Predicated region
  $region10: #{smplify_camera_init_loss.1} parent=0 // pred_check
    _
  $region11: #{smplify_camera_init_loss.1} parent=0 // pred_check_branch
    %14 = sbr.rel (0) target = $region13
  $region12: #{smplify_camera_init_loss.1} parent=0 // pred_region
    _
  $region13: #{smplify_camera_init_loss.1} parent=0 // pred_fallthru
    _
  // Predicated region
  $region14: #{smplify_camera_init_loss.1} parent=0 // pred_check
    _
  $region15: #{smplify_camera_init_loss.1} parent=0 // pred_check_branch
    %16 = sbr.rel (0) target = $region17
  $region16: #{smplify_camera_init_loss.1} parent=0 // pred_region
    _
  $region17: #{smplify_camera_init_loss.1} parent=0 // pred_fallthru
    _
  %v17 = vld [vmem:[%s0] sm:$0xff]
  %v18 = vld [vmem:[%s0 + $0x8] sm:$0xff]
  %s19 = scalar_lea.vmem %s0, 16
  %v20 = vld [vmem:[%s19] sm:$0xff]
  %v21 = vld [vmem:[%s19 + $0x8] sm:$0xff]
  %s22 = scalar_lea.vmem %s0, 32
  %v23 = vld [vmem:[%s22] sm:$0xff]
  %v24 = vld [vmem:[%s22 + $0x8] sm:$0xff]
  %v25 = vld [vmem:[%s1] sm:$0xff]
  %v26 = vld [vmem:[%s1 + $0x8] sm:$0xff]
  %s27 = scalar_lea.vmem %s1, 16
  %v28 = vld [vmem:[%s27] sm:$0xff]
  %v29 = vld [vmem:[%s27 + $0x8] sm:$0xff]
  %v30 = vld [vmem:[%s3] sm:$0xff]
  %v31 = vld [vmem:[%s3 + $0x8] sm:$0xff]
  %v32 = vlaneseq
  %v33 = vshrl.u32 %v32, 7
  %v34 = vsub.s32 0, %v33
  %v35 = vrot.slane %v30, %v34
  %v36 = vmul.f32 %v35, %v17
  %v37 = vmul.f32 %v35, %v18
  %v38 = vlaneseq
  %v39 = vshrl.u32 %v38, 7
  %v40 = vsub.s32 1, %v39
  %v41 = vrot.slane %v30, %v40
  %v42 = vmul.f32 %v41, %v20
  %v43 = vmul.f32 %v41, %v21
  %v44 = vadd.f32 %v36, %v42
  %v45 = vadd.f32 %v37, %v43
  %v46 = vlaneseq
  %v47 = vshrl.u32 %v46, 7
  %v48 = vsub.s32 2, %v47
  %v49 = vrot.slane %v30, %v48
  %v50 = vmul.f32 %v49, %v23
  %v51 = vmul.f32 %v49, %v24
  %v52 = vadd.f32 %v44, %v50
  %v53 = vadd.f32 %v45, %v51
  %v54 = vlaneseq
  %v55 = vshrl.u32 %v54, 7
  %v56 = vsub.s32 1, %v55
  %v57 = vrot.slane %v31, %v56
  %v58 = vadd.f32 %v52, %v57
  %v59 = vadd.f32 %v53, %v57
  %v60 = vlaneseq
  %v61 = vshrl.u32 %v60, 7
  %v62 = vsub.s32 3, %v61
  %v63 = vrot.slane %v30, %v62
  %v64 = vmul.f32 %v63, %v17
  %v65 = vmul.f32 %v63, %v18
  %v66 = vlaneseq
  %v67 = vshrl.u32 %v66, 7
  %v68 = vsub.s32 4, %v67
  %v69 = vrot.slane %v30, %v68
  %v70 = vmul.f32 %v69, %v20
  %v71 = vmul.f32 %v69, %v21
  %v72 = vadd.f32 %v64, %v70
  %v73 = vadd.f32 %v65, %v71
  %v74 = vlaneseq
  %v75 = vshrl.u32 %v74, 7
  %v76 = vsub.s32 5, %v75
  %v77 = vrot.slane %v30, %v76
  %v78 = vmul.f32 %v77, %v23
  %v79 = vmul.f32 %v77, %v24
  %v80 = vadd.f32 %v72, %v78
  %v81 = vadd.f32 %v73, %v79
  %v82 = vlaneseq
  %v83 = vshrl.u32 %v82, 7
  %v84 = vsub.s32 2, %v83
  %v85 = vrot.slane %v31, %v84
  %v86 = vadd.f32 %v80, %v85
  %v87 = vadd.f32 %v81, %v85
  %v88 = vlaneseq
  %v89 = vshrl.u32 %v88, 7
  %v90 = vsub.s32 6, %v89
  %v91 = vrot.slane %v30, %v90
  %v92 = vmul.f32 %v91, %v17
  %v93 = vmul.f32 %v91, %v18
  %v94 = vlaneseq
  %v95 = vshrl.u32 %v94, 7
  %v96 = vsub.s32 7, %v95
  %v97 = vrot.slane %v30, %v96
  %v98 = vmul.f32 %v97, %v20
  %v99 = vmul.f32 %v97, %v21
  %v100 = vadd.f32 %v92, %v98
  %v101 = vadd.f32 %v93, %v99
  %v102 = vlaneseq
  %v103 = vshrl.u32 %v102, 7
  %v104 = vsub.s32 0, %v103
  %v105 = vrot.slane %v31, %v104
  %v106 = vmul.f32 %v105, %v23
  %v107 = vmul.f32 %v105, %v24
  %v108 = vadd.f32 %v100, %v106
  %v109 = vadd.f32 %v101, %v107
  %v110 = vlaneseq
  %v111 = vshrl.u32 %v110, 7
  %v112 = vsub.s32 3, %v111
  %v113 = vrot.slane %v31, %v112
  %v114 = vadd.f32 %v108, %v113
  %v115 = vadd.f32 %v109, %v113
  %v116 = vrcp.pop %v114
  %v117 = vrcp.pop %v115
  %v118 = vmul.f32 %v114, %v116
  %v119 = vmul.f32 %v115, %v117
  %v120 = vsub.f32 2.0, %v118
  %v121 = vsub.f32 2.0, %v119
  %v122 = vmul.f32 %v116, %v120
  %v123 = vmul.f32 %v117, %v121
  %v124 = vmul.f32 %v58, %v122
  %v125 = vmul.f32 %v59, %v123
  %v126 = vlaneseq
  %v127 = vshrl.u32 %v126, 7
  %v128 = vsub.s32 4, %v127
  %v129 = vrot.slane %v31, %v128
  %v130 = vadd.f32 %v124, %v129
  %v131 = vadd.f32 %v125, %v129
  %v132 = vmul.f32 %v86, %v122
  %v133 = vmul.f32 %v87, %v123
  %v134 = vlaneseq
  %v135 = vshrl.u32 %v134, 7
  %v136 = vsub.s32 5, %v135
  %v137 = vrot.slane %v31, %v136
  %v138 = vadd.f32 %v132, %v137
  %v139 = vadd.f32 %v133, %v137
  %v140 = vsub.f32 %v25, %v130
  %v141 = vsub.f32 %v26, %v131
  %v142 = vmul.f32 %v140, %v140
  %v143 = vmul.f32 %v141, %v141
  %v144 = vsub.f32 %v28, %v138
  %v145 = vsub.f32 %v29, %v139
  %v146 = vmul.f32 %v144, %v144
  %v147 = vmul.f32 %v145, %v145
  %v148 = vadd.f32 %v142, %v146
  %v149 = vadd.f32 %v143, %v147
  %v150 = vld [vmem:[%s2] sm:$0xff]
  %v151 = vld [vmem:[%s2 + $0x8] sm:$0xff]
  %153 = vset.pattern.permute.xlu0 0
  %154 = vperm.xlu0 %153, %v150
  %v155 = vpop.permute.xlu0 %154
  %158 = vset.pattern.permute.xlu0 0
  %159 = vperm.xlu0 %158, %v151
  %v160 = vpop.permute.xlu0 %159
  %v162 = vmul.f32 %v148, %v155
  %v163 = vmul.f32 %v149, %v160
  %v164 = vadd.f32 %v162, %v163
  %165 = vst [vmem:[%s4] sm:$0xff] %v164
  // Predicated region
  $region18: #{smplify_camera_init_loss.1} parent=0 // pred_check
    _
  $region19: #{smplify_camera_init_loss.1} parent=0 // pred_check_branch
    %167 = sbr.rel (0) target = $region21
  $region20: #{smplify_camera_init_loss.1} parent=0 // pred_region
    _
  $region21: #{smplify_camera_init_loss.1} parent=0 // pred_fallthru
    _
  // Predicated region
  $region22: #{smplify_camera_init_loss.1} parent=0 // pred_check
    _
  $region23: #{smplify_camera_init_loss.1} parent=0 // pred_check_branch
    %169 = sbr.rel (0) target = $region25
  $region24: #{smplify_camera_init_loss.1} parent=0 // pred_region
    _
  $region25: #{smplify_camera_init_loss.1} parent=0 // pred_fallthru
    _

</llo_original>
